<compile_context>
chip_gen: v6e
topology: v6e:2x2x1
jax: 0.10.0
libtpu: 0.0.40
codegen_flags: <defaults>
</compile_context>

<pallas_src>
import jax
import jax.numpy as jnp
from jax import lax
from jax.experimental import pallas as pl
from jax.experimental.pallas import tpu as pltpu


def _fused_linear_kernel(x_ref, wT_ref, b_ref, oT_ref):
    # x_ref : (TB, F)  streamed batch tile (natural row-major layout)
    # wT_ref: (C, F)   fused weight (transposed), VMEM-resident across grid
    # b_ref : (C, 1)   fused bias
    # oT_ref: (C, TB)  lane-dense transposed output tile
    #
    # out_T[c, t] = sum_f wT[c, f] * x[t, f]   (single MXU pass, f32 accum)
    out_t = lax.dot_general(
        wT_ref[...], x_ref[...],
        dimension_numbers=(((1,), (1,)), ((), ())),   # contract over F
        preferred_element_type=jnp.float32)            # (C, TB)
    # TODO(synk): Dropout(0.1) is identity in eval mode; training-mode
    # stochastic masking (pltpu.prng_*) intentionally not applied here.
    oT_ref[...] = (out_t + b_ref[...]).astype(oT_ref.dtype)


def regression_model_forward(x, w1, b1, w2, b2, *, block_b=8192):
    """Eval-mode forward of RegressionModel.

    x : (B, F) f32
    w1: (F, 8), b1: (8,), w2: (8, C), b2: (C,)  -- weights in (in, out) layout.
    Returns (B, C).
    """
    B, F = x.shape
    C = w2.shape[1]

    # Algebraic fusion of the two linears (Dropout(0.1) == identity in eval).
    # Precomputed in f32 with HIGHEST precision so no extra rounding step is
    # introduced relative to the two-matmul reference.
    w_fused_t = jnp.dot(w2.T, w1.T, precision=lax.Precision.HIGHEST)      # (C, F)
    b_fused = (jnp.dot(b1, w2, precision=lax.Precision.HIGHEST) + b2)     # (C,)
    b_fused = b_fused.reshape(C, 1)

    # Batch tile: ~1 MiB of x per step keeps the pipeline near the HBM
    # roofline; tiny batches use a single full-array block (no tiling needed).
    tb = block_b if B > block_b else B
    grid = (pl.cdiv(B, tb),)

    cost = pl.CostEstimate(
        flops=2 * B * F * C,
        transcendentals=0,
        bytes_accessed=4 * (B * F + C * F + C + B * C))

    out_t = pl.pallas_call(
        _fused_linear_kernel,
        out_shape=jax.ShapeDtypeStruct((C, B), x.dtype),
        grid=grid,
        in_specs=[
            pl.BlockSpec((tb, F), lambda i: (i, 0)),        # streamed x tile
            pl.BlockSpec((C, F), lambda i: (0, 0)),         # resident fused W^T
            pl.BlockSpec((C, 1), lambda i: (0, 0)),         # resident fused bias
        ],
        out_specs=pl.BlockSpec((C, tb), lambda i: (0, i)),  # lane-dense output
        compiler_params=pltpu.CompilerParams(
            dimension_semantics=("parallel",),              # 2 TCs on v7x
            vmem_limit_bytes=32 * 1024 * 1024,              # safe on 64MiB v7x
        ),
        cost_estimate=cost,
    )(x, w_fused_t, b_fused)

    # (C, B) -> (B, C): tiny layout-only transpose; fuses away under jit when
    # a downstream consumer exists.
    return out_t.T


regression_model_forward_jit = jax.jit(
    regression_model_forward, static_argnames=("block_b",))


if __name__ == "__main__":
    # args.num_feature = 32, args.num_classes = 4, batch = 8
    num_feature, hidden, num_classes, batch = 32, 8, 4, 8

    key = jax.random.PRNGKey(0)
    kx, kw1, kb1, kw2, kb2, kx2 = jax.random.split(key, 6)

    # PyTorch layout is W (out, in); the wrapper takes (in, out), so build
    # (out, in) and pass the transpose (exactly as torch's forward computes).
    w1_t = jax.random.normal(kw1, (hidden, num_feature), jnp.float32) * 0.1
    b1 = jax.random.normal(kb1, (hidden,), jnp.float32) * 0.1
    w2_t = jax.random.normal(kw2, (num_classes, hidden), jnp.float32) * 0.1
    b2 = jax.random.normal(kb2, (num_classes,), jnp.float32) * 0.1

    def reference(xv):  # eval-mode dropout == identity
        return (xv @ w1_t.T + b1) @ w2_t.T + b2

    # --- small demo batch (module-scale shapes) ---
    x = jax.random.normal(kx, (batch, num_feature), dtype=jnp.float32)
    out = regression_model_forward_jit(x, w1_t.T, b1, w2_t.T, b2)
    out = jax.block_until_ready(out)
    assert out.shape == (batch, num_classes)
    assert jnp.allclose(out, reference(x), atol=1e-4, rtol=1e-4)

    # --- larger batch to exercise the multi-step streaming grid ---
    big_batch = 16384  # 2 grid steps at block_b=8192
    x2 = jax.random.normal(kx2, (big_batch, num_feature), dtype=jnp.float32)
    out2 = regression_model_forward_jit(x2, w1_t.T, b1, w2_t.T, b2)
    out2 = jax.block_until_ready(out2)
    assert out2.shape == (big_batch, num_classes)
    assert jnp.allclose(out2, reference(x2), atol=1e-4, rtol=1e-4)

    print("KERNEL_OK")
</pallas_src>

<mosaic_0001>
module attributes {stable_mosaic.version = 11 : i64} {
  func.func @_fused_linear_kernel(%arg0: i32, %arg1: memref<8x32xf32, #tpu.memory_space<vmem>>, %arg2: memref<4x32xf32, #tpu.memory_space<vmem>>, %arg3: memref<4x1xf32, #tpu.memory_space<vmem>>, %arg4: memref<4x8xf32, #tpu.memory_space<vmem>>) attributes {dimension_semantics = [#tpu.dimension_semantics<parallel>], iteration_bounds = array<i64: 1>, scalar_prefetch = 0 : i64, scratch_operands = 0 : i64, tpu.core_type = #tpu.core_type<tc>, window_params = [{transform_indices = @transform_0, window_bounds = array<i64: 8, 32>}, {pipeline_mode = #tpu.pipeline_mode<synchronous>, transform_indices = @transform_1, window_bounds = array<i64: 4, 32>}, {pipeline_mode = #tpu.pipeline_mode<synchronous>, transform_indices = @transform_2, window_bounds = array<i64: 4, 1>}, {transform_indices = @transform_3, window_bounds = array<i64: 4, 8>}]} {
    %c0 = arith.constant 0 : index
    %c0_0 = arith.constant 0 : index
    %0 = vector.load %arg2[%c0, %c0_0] : memref<4x32xf32, #tpu.memory_space<vmem>>, vector<4x32xf32>
    %c0_1 = arith.constant 0 : index
    %c0_2 = arith.constant 0 : index
    %1 = vector.load %arg1[%c0_1, %c0_2] : memref<8x32xf32, #tpu.memory_space<vmem>>, vector<8x32xf32>
    %cst = arith.constant dense<0.000000e+00> : vector<4x8xf32>
    %2 = tpu.matmul %0, %1, %cst {dimension_numbers = #tpu.dot_dimension_numbers<[1], [1], [0], [0], [0, 0, 1, 0], [], []>} : vector<4x32xf32>, vector<8x32xf32>, vector<4x8xf32> -> vector<4x8xf32>
    %c0_3 = arith.constant 0 : index
    %c0_4 = arith.constant 0 : index
    %3 = vector.load %arg3[%c0_3, %c0_4] : memref<4x1xf32, #tpu.memory_space<vmem>>, vector<4x1xf32>
    %4 = vector.broadcast %3 : vector<4x1xf32> to vector<4x8xf32>
    %5 = arith.addf %2, %4 : vector<4x8xf32>
    %c0_5 = arith.constant 0 : index
    %c0_6 = arith.constant 0 : index
    %6 = vector.load %arg4[%c0_5, %c0_6] : memref<4x8xf32, #tpu.memory_space<vmem>>, vector<4x8xf32>
    tpu.vector_store %arg4[%c0_5, %c0_6], %5 {strides = array<i32>} : memref<4x8xf32, #tpu.memory_space<vmem>>, vector<4x8xf32>,
    return
  }
  func.func @transform_0(%arg0: i32) -> (i32, i32) {
    %c0_i32 = arith.constant 0 : i32
    %c0_i32_0 = arith.constant 0 : i32
    return %arg0, %c0_i32 : i32, i32
  }
  func.func @transform_1(%arg0: i32) -> (i32, i32) {
    %c0_i32 = arith.constant 0 : i32
    %c0_i32_0 = arith.constant 0 : i32
    %c0_i32_1 = arith.constant 0 : i32
    return %c0_i32, %c0_i32_0 : i32, i32
  }
  func.func @transform_2(%arg0: i32) -> (i32, i32) {
    %c0_i32 = arith.constant 0 : i32
    %c0_i32_0 = arith.constant 0 : i32
    %c0_i32_1 = arith.constant 0 : i32
    return %c0_i32, %c0_i32_0 : i32, i32
  }
  func.func @transform_3(%arg0: i32) -> (i32, i32) {
    %c0_i32 = arith.constant 0 : i32
    %c0_i32_0 = arith.constant 0 : i32
    return %c0_i32, %arg0 : i32, i32
  }
}

</mosaic_0001>

<llo_original>
// kernel: regression_model_forward.1
$region0: #{regression_model_forward.1}
  #allocation0 [shape = 'u32[]', space=smem, size = 0x4, offset = 0x4, fixed_abs, tag = 'smem constant byte address 0x4 - core index']
  #allocation1 [shape = 'u32[144,128]{1,0:T(1,128)}', space=vmem, size = 0x12000, scoped, tag = 'internal scratch']
  %s0 = inlined_call_operand.vmem [shape: f32[8,32], index: 0, kind: input, shape index: {}]
  %s1 = inlined_call_operand.vmem [shape: f32[4,32], index: 1, kind: input, shape index: {}]
  %s2 = inlined_call_operand.vmem [shape: f32[4,1], index: 2, kind: input, shape index: {}]
  %s3 = inlined_call_operand.hbm [shape: f32[4,8], index: 3, kind: output, shape index: {}]
  %s4 = sld [smem:[#allocation0]]
  $region22: #{regression_model_forward.1} parent=0
    _
  %s6 = ssub.s32 1, %s4
  %s7 = scalar_select 0, %s6, %s4
  $region1: #{regression_model_forward.1} parent=0
    #allocation2 [shape = 'u8[2048]{0}', space=vmem, size = 0x800, scoped, tag = 'output window, operand 0, single buffered']
    #allocation3 [shape = 's32[1]{0}', space=sflag, size = 0x4, scoped, tag = 'scoped memory for regression_model_forward.1']
    %8 = vsyncpa [#allocation3], 0
    // Predicated region
    $region2: #{regression_model_forward.1} parent=1 // pred_check
      _
    $region3: #{regression_model_forward.1} parent=1 // pred_check_branch
      %10 = sbr.rel (0) target = $region5
    $region4: #{regression_model_forward.1} parent=1 // pred_region
      _
    $region5: #{regression_model_forward.1} parent=1 // pred_fallthru
      _
    // Predicated region
    $region6: #{regression_model_forward.1} parent=1 // pred_check
      _
    $region7: #{regression_model_forward.1} parent=1 // pred_check_branch
      %12 = sbr.rel (0) target = $region9
    $region8: #{regression_model_forward.1} parent=1 // pred_region
      _
    $region9: #{regression_model_forward.1} parent=1 // pred_fallthru
      _
    // Predicated region
    $region10: #{regression_model_forward.1} parent=1 // pred_check
      _
    $region11: #{regression_model_forward.1} parent=1 // pred_check_branch
      %14 = sbr.rel (0) target = $region13
    $region12: #{regression_model_forward.1} parent=1 // pred_region
      _
    $region13: #{regression_model_forward.1} parent=1 // pred_fallthru
      _
    %v15 = vld [vmem:[%s1] sm:$0xf]
    %v16 = vld [vmem:[%s0] sm:$0xff]
    %v17 = vld [vmem:[%s2] sm:$0xf]
    %19 = vset.pattern.permute.xlu0 0
    %20 = vperm.xlu0 %19, %v17
    %v21 = vpop.permute.xlu0 %20
    %vm23 = vcmask 261120
    %v25 = vsel %vm23, %v15, 0
    %v28 = vsel %vm23, %v16, 0
    %30 = vmatprep.subr.mxu0 0.0
    %31 = vmatpush1.xpose.msra.mxu0 0.0
    %32 = vmatprep.subr.mxu0 0.0
    %33 = vmatpush1.xpose.msra.mxu0 0.0
    %34 = vmatprep.subr.mxu0 0.0
    %35 = vmatpush1.xpose.msra.mxu0 0.0
    %36 = vmatprep.subr.mxu0 0.0
    %37 = vmatpush1.xpose.msra.mxu0 0.0
    %38 = vmatprep.subr.mxu0 0.0
    %39 = vmatpush1.xpose.msra.mxu0 0.0
    %40 = vmatprep.subr.mxu0 0.0
    %41 = vmatpush1.xpose.msra.mxu0 0.0
    %42 = vmatprep.subr.mxu0 0.0
    %43 = vmatpush1.xpose.msra.mxu0 0.0
    %44 = vmatprep.subr.mxu0 0.0
    %45 = vmatpush1.xpose.msra.mxu0 0.0
    %46 = vmatprep.subr.mxu0 0.0
    %47 = vmatpush1.xpose.msra.mxu0 0.0
    %48 = vmatprep.subr.mxu0 0.0
    %49 = vmatpush1.xpose.msra.mxu0 0.0
    %50 = vmatprep.subr.mxu0 0.0
    %51 = vmatpush1.xpose.msra.mxu0 0.0
    %52 = vmatprep.subr.mxu0 0.0
    %53 = vmatpush1.xpose.msra.mxu0 0.0
    %54 = vmatprep.subr.mxu0 0.0
    %55 = vmatpush1.xpose.msra.mxu0 0.0
    %56 = vmatprep.subr.mxu0 0.0
    %57 = vmatpush1.xpose.msra.mxu0 0.0
    %58 = vmatprep.subr.mxu0 0.0
    %59 = vmatpush1.xpose.msra.mxu0 0.0
    %60 = vmatprep.subr.mxu0 0.0
    %61 = vmatpush1.xpose.msra.mxu0 %v28
    %62 = vmatprep.subr.mxu0 0.0
    %63 = vmatpush2.xpose.msra.mxu0 0.0
    %64 = vmatprep.subr.mxu0 0.0
    %65 = vmatpush2.xpose.msra.mxu0 0.0
    %66 = vmatprep.subr.mxu0 0.0
    %67 = vmatpush2.xpose.msra.mxu0 0.0
    %68 = vmatprep.subr.mxu0 0.0
    %69 = vmatpush2.xpose.msra.mxu0 0.0
    %70 = vmatprep.subr.mxu0 0.0
    %71 = vmatpush2.xpose.msra.mxu0 0.0
    %72 = vmatprep.subr.mxu0 0.0
    %73 = vmatpush2.xpose.msra.mxu0 0.0
    %74 = vmatprep.subr.mxu0 0.0
    %75 = vmatpush2.xpose.msra.mxu0 0.0
    %76 = vmatprep.subr.mxu0 0.0
    %77 = vmatpush2.xpose.msra.mxu0 0.0
    %78 = vmatprep.subr.mxu0 0.0
    %79 = vmatpush2.xpose.msra.mxu0 0.0
    %80 = vmatprep.subr.mxu0 0.0
    %81 = vmatpush2.xpose.msra.mxu0 0.0
    %82 = vmatprep.subr.mxu0 0.0
    %83 = vmatpush2.xpose.msra.mxu0 0.0
    %84 = vmatprep.subr.mxu0 0.0
    %85 = vmatpush2.xpose.msra.mxu0 0.0
    %86 = vmatprep.subr.mxu0 0.0
    %87 = vmatpush2.xpose.msra.mxu0 0.0
    %88 = vmatprep.subr.mxu0 0.0
    %89 = vmatpush2.xpose.msra.mxu0 0.0
    %90 = vmatprep.subr.mxu0 0.0
    %91 = vmatpush2.xpose.msra.mxu0 0.0
    %92 = vmatprep.subr.mxu0 0.0
    %93 = vmatpush2.xpose.msra.mxu0 0.0
    %94 = vmatprep.mubr.f32.mxu0 0.0
    %95 = vmatmul.mubr.f32.gmra.mxu0 %v25
    %v96 = vpop.f32.mrf.mxu0
    %v97 = vadd.f32 %v21, %v96
    %v98 = vpop.f32.mrf.mxu0
    %99 = vdwg.mxu0
    %vm100 = vcmask 60416
    %101 = vst.msk [vmem:[#allocation2] sm:$0xf] %vm100, %v97
    // Predicated region
    $region14: #{regression_model_forward.1} parent=1 // pred_check
      _
    $region15: #{regression_model_forward.1} parent=1 // pred_check_branch
      %103 = sbr.rel (0) target = $region17
    $region16: #{regression_model_forward.1} parent=1 // pred_region
      %s105 = ssub.s32 64, 64
      %106 = vsyncadd [#allocation3], %s105
      %s108 = sshll.u32 [#allocation2], 4
      %s109 = int_to_ptr.vmem [resolvable:$true] %s108
      %111 = dma.vmem_to_hbm [thread:$0]  %s109, 64, %s3, [#allocation3]
    $region17: #{regression_model_forward.1} parent=1 // pred_fallthru
      _
    // Predicated region
    $region18: #{regression_model_forward.1} parent=1 // pred_check
      _
    $region19: #{regression_model_forward.1} parent=1 // pred_check_branch
      %113 = sbr.rel (0) target = $region21
    $region20: #{regression_model_forward.1} parent=1 // pred_region
      %114 = dma.done [#allocation3], 64
    $region21: #{regression_model_forward.1} parent=1 // pred_fallthru
      _
    %115 = vsyncpa [#allocation3], 1

</llo_original>
